<compile_context>
chip_gen: v7x
topology: tpu7x:2x2x1
jax: 0.10.0
libtpu: 0.0.40
codegen_flags: <defaults>
</compile_context>

<pallas_src>
import jax
import jax.numpy as jnp
from jax.experimental import pallas as pl
from jax.experimental.pallas import tpu as pltpu


def _round_up(x, m):
    return ((x + m - 1) // m) * m


def _cdiv(a, b):
    return -(-a // b)


def _vmem_cap_bytes():
    """Usable scoped-VMEM cap with headroom (generation-aware when possible)."""
    cap = None
    try:
        info = pltpu.get_tpu_info()
        cap = getattr(info, "vmem_capacity_bytes", None)
    except Exception:
        cap = None
    if not cap:
        cap = 64 << 20        # conservative: v7x per-TensorCore VMEM
    return (3 * int(cap)) // 4


def _ensemble_kernel(w_ref, *rest):
    """rest = (x_ref_0, ..., x_ref_{S-1}, out_ref).

    Per tile:
      w_ref   : (S, TF)   softmax'd ensembling weights (f32)
      x_ref_s : (TB, TF)  learner-s logits (native dtype)
      out_ref : (TB, TF)  ensembled logits
    """
    x_refs, out_ref = rest[:-1], rest[-1]

    p = None   # sum_s w_s * sigmoid(x_s)
    q = None   # sum_s w_s * sigmoid(-x_s)  (== 1 - p, no cancellation)
    for s, x_ref in enumerate(x_refs):
        x = x_ref[...].astype(jnp.float32)                # (TB, TF)
        e = jnp.exp(-jnp.abs(x))                          # EUP (heavy)
        d = 1.0 + e
        r = pl.reciprocal(d, approx=True)                 # EUP (cheap)
        r = r * (2.0 - d * r)                             # Newton step, VPU (free)
        er = e * r
        pos = x >= 0.0
        sig = jnp.where(pos, r, er)                       # sigmoid(x)
        csig = jnp.where(pos, er, r)                      # sigmoid(-x)
        w_s = w_ref[s:s + 1, :]                           # (1, TF) sublane-broadcast
        if p is None:
            p, q = w_s * sig, w_s * csig
        else:
            p, q = p + w_s * sig, q + w_s * csig

    # logit(p) = log p - log(1 - p); 1 - p was accumulated directly as q.
    out_ref[...] = (jnp.log(p) - jnp.log(q)).astype(out_ref.dtype)


def softmax_weighted_ensemble_binary(weight_l, *xs, tile_b=512, tile_f=1024,
                                     out_dtype=None):
    """weight_l: (F, S); each x in xs: (B, F). Returns (B, F) ensembled logits."""
    S = len(xs)
    assert S >= 1
    B, F = xs[0].shape
    assert weight_l.shape == (F, S), (weight_l.shape, (F, S))
    in_dtype = xs[0].dtype
    for x in xs:
        assert x.shape == (B, F) and x.dtype == in_dtype, (x.shape, x.dtype)
    if out_dtype is None:
        out_dtype = in_dtype

    # Softmax'd ensembling weights laid out (S, F): labels -> lanes. Tiny, f32.
    w = jax.nn.softmax(weight_l.astype(jnp.float32), axis=1).T   # (S, F)

    # Sublane multiple is dtype-aware (8 for f32, 16 for bf16, 32 for 8-bit).
    in_bytes = jnp.dtype(in_dtype).itemsize
    out_bytes = jnp.dtype(out_dtype).itemsize
    b_mult = max(8 * (4 // in_bytes), 8 * (4 // out_bytes))

    # Clamp tiles to the (unpadded) problem size. No host-side padding.
    tile_f = min(_round_up(tile_f, 128), _round_up(F, 128))
    tile_b = min(_round_up(tile_b, b_mult), _round_up(B, b_mult))

    # Keep >= 2 tiles along a parallel axis when possible (v7x dual-TC).
    if _cdiv(F, tile_f) == 1 and _cdiv(B, tile_b) == 1:
        if F > 128:
            tile_f = _round_up(_cdiv(F, 2), 128)
        elif B > b_mult:
            tile_b = _round_up(_cdiv(B, 2), b_mult)

    # VMEM budget: double-buffered DMA tiles + live f32 temporaries + weights.
    def vmem_need(tb, tf):
        dma = 2 * tb * tf * (S * in_bytes + out_bytes)     # double-buffered I/O
        tmp = 4 * tb * tf * 4                              # p, q + working f32 tiles
        wts = 2 * S * tf * 4
        return dma + tmp + wts + (2 << 20)

    cap = _vmem_cap_bytes()
    while vmem_need(tile_b, tile_f) > cap and tile_b > b_mult:
        tile_b = max(b_mult, _round_up(tile_b // 2, b_mult))
    vmem_limit = int(min(max(vmem_need(tile_b, tile_f), 16 << 20), cap))

    # Batch axis innermost: the weight tile's block index is invariant there.
    grid = (_cdiv(F, tile_f), _cdiv(B, tile_b))

    in_specs = [pl.BlockSpec((S, tile_f), lambda j, i: (0, j))]         # weights
    in_specs += [pl.BlockSpec((tile_b, tile_f), lambda j, i: (i, j))    # x_s
                 for _ in range(S)]

    return pl.pallas_call(
        _ensemble_kernel,
        out_shape=jax.ShapeDtypeStruct((B, F), out_dtype),
        grid_spec=pltpu.PrefetchScalarGridSpec(
            num_scalar_prefetch=0,
            grid=grid,
            in_specs=in_specs,
            out_specs=pl.BlockSpec((tile_b, tile_f), lambda j, i: (i, j)),
        ),
        compiler_params=pltpu.CompilerParams(
            dimension_semantics=("parallel", "parallel"),
            vmem_limit_bytes=vmem_limit),
    )(w, *xs)


def _reference(weight_l, *xs):
    """Pure-JAX transcription of the PyTorch forward (log-space, for checking)."""
    x = jnp.stack(xs, axis=2)                                # (B, F, S)
    logw = jax.nn.log_softmax(weight_l.astype(jnp.float32), axis=1)
    logp = jax.nn.log_sigmoid(x.astype(jnp.float32))
    logwp = logw[None, :, :] + logp
    logp_ens = jax.scipy.special.logsumexp(logwp, axis=-1)   # (B, F)
    return logp_ens - jnp.log(-jnp.expm1(logp_ens))


if __name__ == "__main__":
    key = jax.random.PRNGKey(0)

    # --- Test 1: f32, module-default weights (zeros -> uniform ensembling) --
    batch, num_labels, num_learners = 8, 256, 3
    weight_l = jnp.zeros((num_labels, num_learners), dtype=jnp.float32)
    keys = jax.random.split(key, num_learners + 1)
    xs = [3.0 * jax.random.normal(k, (batch, num_labels), dtype=jnp.float32)
          for k in keys[:num_learners]]

    out = jax.block_until_ready(softmax_weighted_ensemble_binary(weight_l, *xs))
    ref = _reference(weight_l, *xs)
    assert out.shape == (batch, num_labels) and out.dtype == jnp.float32
    err1 = float(jnp.max(jnp.abs(out - ref)))
    assert jnp.allclose(out, ref, atol=1e-3, rtol=1e-3), err1

    # --- Test 2: bf16 inputs, non-aligned shapes (ragged edge blocks) -------
    batch2, num_labels2, num_learners2 = 5, 200, 4
    k_w, k_x = jax.random.split(keys[-1])
    weight_l2 = jax.random.normal(k_w, (num_labels2, num_learners2),
                                  dtype=jnp.float32)
    xs2 = [(2.0 * jax.random.normal(kk, (batch2, num_labels2),
                                    dtype=jnp.float32)).astype(jnp.bfloat16)
           for kk in jax.random.split(k_x, num_learners2)]

    out2 = jax.block_until_ready(
        softmax_weighted_ensemble_binary(weight_l2, *xs2))
    ref2 = _reference(weight_l2, *[x.astype(jnp.float32) for x in xs2])
    assert out2.shape == (batch2, num_labels2) and out2.dtype == jnp.bfloat16
    err2 = float(jnp.max(jnp.abs(out2.astype(jnp.float32) - ref2)))
    assert jnp.allclose(out2.astype(jnp.float32), ref2, atol=8e-2, rtol=2e-2), err2

    print("KERNEL_OK")
</pallas_src>

<mosaic_0001>
module attributes {stable_mosaic.version = 11 : i64} {
  func.func @_ensemble_kernel(%arg0: i32, %arg1: i32, %arg2: memref<3x128xf32, #tpu.memory_space<vmem>>, %arg3: memref<8x128xf32, #tpu.memory_space<vmem>>, %arg4: memref<8x128xf32, #tpu.memory_space<vmem>>, %arg5: memref<8x128xf32, #tpu.memory_space<vmem>>, %arg6: memref<8x128xf32, #tpu.memory_space<vmem>>) attributes {dimension_semantics = [#tpu.dimension_semantics<parallel>, #tpu.dimension_semantics<parallel>], iteration_bounds = array<i64: 2, 1>, scalar_prefetch = 0 : i64, scratch_operands = 0 : i64, tpu.core_type = #tpu.core_type<tc>, window_params = [{transform_indices = @transform_0, window_bounds = array<i64: 3, 128>}, {transform_indices = @transform_1, window_bounds = array<i64: 8, 128>}, {transform_indices = @transform_2, window_bounds = array<i64: 8, 128>}, {transform_indices = @transform_3, window_bounds = array<i64: 8, 128>}, {transform_indices = @transform_4, window_bounds = array<i64: 8, 128>}]} {
    %c0 = arith.constant 0 : index
    %c0_0 = arith.constant 0 : index
    %0 = vector.load %arg3[%c0, %c0_0] : memref<8x128xf32, #tpu.memory_space<vmem>>, vector<8x128xf32>
    %1 = math.absf %0 : vector<8x128xf32>
    %cst = arith.constant 0.000000e+00 : f32
    %2 = vector.broadcast %cst : f32 to vector<8x128xf32>
    %3 = arith.subf %2, %1 : vector<8x128xf32>
    %4 = math.exp %3 : vector<8x128xf32>
    %cst_1 = arith.constant 1.000000e+00 : f32
    %5 = vector.broadcast %cst_1 : f32 to vector<8x128xf32>
    %6 = arith.addf %5, %4 : vector<8x128xf32>
    %7 = tpu.reciprocal %6 {approx = true} : vector<8x128xf32> -> vector<8x128xf32>
    %8 = arith.mulf %6, %7 : vector<8x128xf32>
    %cst_2 = arith.constant 2.000000e+00 : f32
    %9 = vector.broadcast %cst_2 : f32 to vector<8x128xf32>
    %10 = arith.subf %9, %8 : vector<8x128xf32>
    %11 = arith.mulf %7, %10 : vector<8x128xf32>
    %12 = arith.mulf %4, %11 : vector<8x128xf32>
    %cst_3 = arith.constant 0.000000e+00 : f32
    %13 = vector.broadcast %cst_3 : f32 to vector<8x128xf32>
    %14 = arith.cmpf oge, %0, %13 : vector<8x128xf32>
    %15 = arith.select %14, %11, %12 : vector<8x128xi1>, vector<8x128xf32>
    %16 = arith.select %14, %12, %11 : vector<8x128xi1>, vector<8x128xf32>
    %c0_4 = arith.constant 0 : index
    %c0_5 = arith.constant 0 : index
    %17 = vector.load %arg2[%c0_4, %c0_5] : memref<3x128xf32, #tpu.memory_space<vmem>>, vector<1x128xf32>
    %18 = vector.broadcast %17 : vector<1x128xf32> to vector<8x128xf32>
    %19 = arith.mulf %18, %15 : vector<8x128xf32>
    %20 = vector.broadcast %17 : vector<1x128xf32> to vector<8x128xf32>
    %21 = arith.mulf %20, %16 : vector<8x128xf32>
    %c0_6 = arith.constant 0 : index
    %c0_7 = arith.constant 0 : index
    %22 = vector.load %arg4[%c0_6, %c0_7] : memref<8x128xf32, #tpu.memory_space<vmem>>, vector<8x128xf32>
    %23 = math.absf %22 : vector<8x128xf32>
    %cst_8 = arith.constant 0.000000e+00 : f32
    %24 = vector.broadcast %cst_8 : f32 to vector<8x128xf32>
    %25 = arith.subf %24, %23 : vector<8x128xf32>
    %26 = math.exp %25 : vector<8x128xf32>
    %cst_9 = arith.constant 1.000000e+00 : f32
    %27 = vector.broadcast %cst_9 : f32 to vector<8x128xf32>
    %28 = arith.addf %27, %26 : vector<8x128xf32>
    %29 = tpu.reciprocal %28 {approx = true} : vector<8x128xf32> -> vector<8x128xf32>
    %30 = arith.mulf %28, %29 : vector<8x128xf32>
    %cst_10 = arith.constant 2.000000e+00 : f32
    %31 = vector.broadcast %cst_10 : f32 to vector<8x128xf32>
    %32 = arith.subf %31, %30 : vector<8x128xf32>
    %33 = arith.mulf %29, %32 : vector<8x128xf32>
    %34 = arith.mulf %26, %33 : vector<8x128xf32>
    %cst_11 = arith.constant 0.000000e+00 : f32
    %35 = vector.broadcast %cst_11 : f32 to vector<8x128xf32>
    %36 = arith.cmpf oge, %22, %35 : vector<8x128xf32>
    %37 = arith.select %36, %33, %34 : vector<8x128xi1>, vector<8x128xf32>
    %38 = arith.select %36, %34, %33 : vector<8x128xi1>, vector<8x128xf32>
    %c1 = arith.constant 1 : index
    %c0_12 = arith.constant 0 : index
    %39 = vector.load %arg2[%c1, %c0_12] : memref<3x128xf32, #tpu.memory_space<vmem>>, vector<1x128xf32>
    %40 = vector.broadcast %39 : vector<1x128xf32> to vector<8x128xf32>
    %41 = arith.mulf %40, %37 : vector<8x128xf32>
    %42 = arith.addf %19, %41 : vector<8x128xf32>
    %43 = vector.broadcast %39 : vector<1x128xf32> to vector<8x128xf32>
    %44 = arith.mulf %43, %38 : vector<8x128xf32>
    %45 = arith.addf %21, %44 : vector<8x128xf32>
    %c0_13 = arith.constant 0 : index
    %c0_14 = arith.constant 0 : index
    %46 = vector.load %arg5[%c0_13, %c0_14] : memref<8x128xf32, #tpu.memory_space<vmem>>, vector<8x128xf32>
    %47 = math.absf %46 : vector<8x128xf32>
    %cst_15 = arith.constant 0.000000e+00 : f32
    %48 = vector.broadcast %cst_15 : f32 to vector<8x128xf32>
    %49 = arith.subf %48, %47 : vector<8x128xf32>
    %50 = math.exp %49 : vector<8x128xf32>
    %cst_16 = arith.constant 1.000000e+00 : f32
    %51 = vector.broadcast %cst_16 : f32 to vector<8x128xf32>
    %52 = arith.addf %51, %50 : vector<8x128xf32>
    %53 = tpu.reciprocal %52 {approx = true} : vector<8x128xf32> -> vector<8x128xf32>
    %54 = arith.mulf %52, %53 : vector<8x128xf32>
    %cst_17 = arith.constant 2.000000e+00 : f32
    %55 = vector.broadcast %cst_17 : f32 to vector<8x128xf32>
    %56 = arith.subf %55, %54 : vector<8x128xf32>
    %57 = arith.mulf %53, %56 : vector<8x128xf32>
    %58 = arith.mulf %50, %57 : vector<8x128xf32>
    %cst_18 = arith.constant 0.000000e+00 : f32
    %59 = vector.broadcast %cst_18 : f32 to vector<8x128xf32>
    %60 = arith.cmpf oge, %46, %59 : vector<8x128xf32>
    %61 = arith.select %60, %57, %58 : vector<8x128xi1>, vector<8x128xf32>
    %62 = arith.select %60, %58, %57 : vector<8x128xi1>, vector<8x128xf32>
    %c2 = arith.constant 2 : index
    %c0_19 = arith.constant 0 : index
    %63 = vector.load %arg2[%c2, %c0_19] : memref<3x128xf32, #tpu.memory_space<vmem>>, vector<1x128xf32>
    %64 = vector.broadcast %63 : vector<1x128xf32> to vector<8x128xf32>
    %65 = arith.mulf %64, %61 : vector<8x128xf32>
    %66 = arith.addf %42, %65 : vector<8x128xf32>
    %67 = vector.broadcast %63 : vector<1x128xf32> to vector<8x128xf32>
    %68 = arith.mulf %67, %62 : vector<8x128xf32>
    %69 = arith.addf %45, %68 : vector<8x128xf32>
    %70 = math.log %66 : vector<8x128xf32>
    %71 = math.log %69 : vector<8x128xf32>
    %72 = arith.subf %70, %71 : vector<8x128xf32>
    %c0_20 = arith.constant 0 : index
    %c0_21 = arith.constant 0 : index
    %73 = vector.load %arg6[%c0_20, %c0_21] : memref<8x128xf32, #tpu.memory_space<vmem>>, vector<8x128xf32>
    tpu.vector_store %arg6[%c0_20, %c0_21], %72 {strides = array<i32>} : memref<8x128xf32, #tpu.memory_space<vmem>>, vector<8x128xf32>,
    return
  }
  func.func @transform_0(%arg0: i32, %arg1: i32) -> (i32, i32) {
    %c0_i32 = arith.constant 0 : i32
    %c0_i32_0 = arith.constant 0 : i32
    return %c0_i32, %arg0 : i32, i32
  }
  func.func @transform_1(%arg0: i32, %arg1: i32) -> (i32, i32) {
    %c0_i32 = arith.constant 0 : i32
    return %arg1, %arg0 : i32, i32
  }
  func.func @transform_2(%arg0: i32, %arg1: i32) -> (i32, i32) {
    %c0_i32 = arith.constant 0 : i32
    return %arg1, %arg0 : i32, i32
  }
  func.func @transform_3(%arg0: i32, %arg1: i32) -> (i32, i32) {
    %c0_i32 = arith.constant 0 : i32
    return %arg1, %arg0 : i32, i32
  }
  func.func @transform_4(%arg0: i32, %arg1: i32) -> (i32, i32) {
    %c0_i32 = arith.constant 0 : i32
    return %arg1, %arg0 : i32, i32
  }
}

</mosaic_0001>

<llo_original>
// kernel: tpu_custom_call.1
$region0: #{tpu_custom_call.1}
  #allocation0 [shape = 'u32[]', space=smem, size = 0x4, offset = 0x4, fixed_abs, tag = 'smem constant byte address 0x4 - core index']
  #allocation1 [shape = 'u32[144,128]{1,0:T(1,128)}', space=vmem, size = 0x12000, scoped, tag = 'internal scratch']
  %s0 = inlined_call_operand.hbm [shape: f32[3,256], index: 0, kind: input, shape index: {}]
  %s1 = inlined_call_operand.hbm [shape: f32[8,256], index: 1, kind: input, shape index: {}]
  %s2 = inlined_call_operand.hbm [shape: f32[8,256], index: 2, kind: input, shape index: {}]
  %s3 = inlined_call_operand.hbm [shape: f32[8,256], index: 3, kind: input, shape index: {}]
  %s4 = inlined_call_operand.hbm [shape: f32[8,256], index: 4, kind: output, shape index: {}]
  %s5 = sld [smem:[#allocation0]]
  $region65: #{tpu_custom_call.1} parent=0
    _
  %s7 = ssub.s32 1, %s5
  %s8 = scalar_select 0, %s7, %s5
  $region1: #{tpu_custom_call.1} parent=0
    #allocation2 [shape = 'u8[4096]{0}', space=vmem, size = 0x1000, scoped, tag = 'input window, operand 0']
    #allocation3 [shape = 's32[2]{0}', space=sflag, size = 0x8, scoped, tag = 'scoped memory for tpu_custom_call.1']
    #allocation4 [shape = 's32[2]{0}', space=sflag, size = 0x8, scoped, tag = 'scoped memory for tpu_custom_call.1']
    #allocation5 [shape = 'u8[8192]{0}', space=vmem, size = 0x2000, scoped, tag = 'input window, operand 1']
    #allocation6 [shape = 's32[2]{0}', space=sflag, size = 0x8, scoped, tag = 'scoped memory for tpu_custom_call.1']
    #allocation7 [shape = 'u8[8192]{0}', space=vmem, size = 0x2000, scoped, tag = 'input window, operand 2']
    #allocation8 [shape = 'u8[8192]{0}', space=vmem, size = 0x2000, scoped, tag = 'input window, operand 3']
    #allocation9 [shape = 's32[2]{0}', space=sflag, size = 0x8, scoped, tag = 'scoped memory for tpu_custom_call.1']
    #allocation10 [shape = 'u8[8192]{0}', space=vmem, size = 0x2000, scoped, tag = 'output window, operand 0']
    %9 = vsyncpa [#allocation3], 0
    %s10 = scalar_lea.sflag [#allocation3], 1
    %11 = vsyncpa %s10, 0
    %12 = vsyncpa [#allocation6], 0
    %s13 = scalar_lea.sflag [#allocation6], 1
    %14 = vsyncpa %s13, 0
    %15 = vsyncpa [#allocation9], 0
    %s16 = scalar_lea.sflag [#allocation9], 1
    %17 = vsyncpa %s16, 0
    %18 = vsyncpa [#allocation4], 0
    %s19 = scalar_lea.sflag [#allocation4], 1
    %20 = vsyncpa %s19, 0
    loop: start=0, step=1, limit=4
    $region2: #{tpu_custom_call.1} parent=1 // loop_pre_header
      _
    $region3: #{tpu_custom_call.1} parent=1 // loop_header
      %s22 = sphi 0, %s26
      %p23 = scmp.ge.s32.totalorder %s22, 4
      %s29 = sphi 0, %s41
      %s30 = sphi 0, %s37
      %s31 = sphi 0, %s29
      %s32 = sphi 0, %s30
      %s33 = sphi 0, %s31
      %s34 = sphi 0, %s32
      %s44 = sphi 0, %s46
      %s47 = sphi 0, %s44
      %s48 = sphi 0, %s47
      %s64 = sphi 0, %s48
      %s72 = sphi 0, %s74
      %s75 = sphi 0, %s72
      %s76 = sphi 0, %s75
      %s92 = sphi 0, %s76
      %s100 = sphi 0, %s102
      %s103 = sphi 0, %s100
      %s104 = sphi 0, %s103
      %s120 = sphi 0, %s104
      %s128 = sphi 0, %s130
      %s131 = sphi 0, %s128
      %s132 = sphi 0, %s131
      %s148 = sphi 0, %s132
      %s156 = sphi 0, %s158
      %s159 = sphi 0, %s156
      %s160 = sphi 0, %s159
      %s176 = sphi 0, %s160
    $region4: #{tpu_custom_call.1} parent=1 // loop_header_branch
      %25 = sbr.rel (%p23) target = $region8
    $region5: #{tpu_custom_call.1} parent=1 // loop_body
      %s27 = ssub.s32 %s22, 1
      %s28 = ssub.s32 %s22, 2
      %s35 = sadd.s32 1, %s30
      %p36 = scmp.ge.s32.totalorder %s35, 1
      %s37 = scalar_select %p36, 0, %s35
      %s38 = sadd.s32 1, %s29
      %s39 = scalar_select %p36, %s38, %s29
      %p40 = scmp.ge.s32.totalorder %s39, 2
      %s41 = scalar_select %p40, 0, %s39
      %s42 = ssub.s32 %s29, %s41
      %p43 = scmp.eq.s32.totalorder %s42, 0
      %s45 = sadd.s32 %s44, 1
      %s46 = scalar_select %p43, %s44, %s45
      %p49 = pneg %p43
      %p50 = scmp.eq.s32.totalorder %s22, 1
      %p51 = por %p49, %p50
      %p52 = scmp.ne.s32.totalorder %s44, %s47
      %p53 = scmp.eq.s32.totalorder %s22, 0
      %p54 = por %p52, %p53
      %p55 = scmp.ne.s32.totalorder %s44, %s47
      %p56 = scmp.eq.s32.totalorder %s27, 1
      %p57 = por %p55, %p56
      %p58 = scmp.ne.s32.totalorder %s47, %s48
      %p59 = scmp.eq.s32.totalorder %s27, 0
      %p60 = por %p58, %p59
      %p61 = scmp.ne.s32.totalorder %s47, %s48
      %p62 = scmp.eq.s32.totalorder %s28, 1
      %p63 = por %p61, %p62
      %p65 = scmp.ne.s32.totalorder %s48, %s64
      %p66 = scmp.eq.s32.totalorder %s28, 0
      %p67 = por %p65, %p66
      %s68 = ssub.s32 %s30, %s37
      %s69 = ssub.s32 %s29, %s41
      %s70 = sor.u32 %s68, %s69
      %p71 = scmp.eq.s32.totalorder %s70, 0
      %s73 = sadd.s32 %s72, 1
      %s74 = scalar_select %p71, %s72, %s73
      %p77 = pneg %p71
      %p78 = scmp.eq.s32.totalorder %s22, 1
      %p79 = por %p77, %p78
      %p80 = scmp.ne.s32.totalorder %s72, %s75
      %p81 = scmp.eq.s32.totalorder %s22, 0
      %p82 = por %p80, %p81
      %p83 = scmp.ne.s32.totalorder %s72, %s75
      %p84 = scmp.eq.s32.totalorder %s27, 1
      %p85 = por %p83, %p84
      %p86 = scmp.ne.s32.totalorder %s75, %s76
      %p87 = scmp.eq.s32.totalorder %s27, 0
      %p88 = por %p86, %p87
      %p89 = scmp.ne.s32.totalorder %s75, %s76
      %p90 = scmp.eq.s32.totalorder %s28, 1
      %p91 = por %p89, %p90
      %p93 = scmp.ne.s32.totalorder %s76, %s92
      %p94 = scmp.eq.s32.totalorder %s28, 0
      %p95 = por %p93, %p94
      %s96 = ssub.s32 %s30, %s37
      %s97 = ssub.s32 %s29, %s41
      %s98 = sor.u32 %s96, %s97
      %p99 = scmp.eq.s32.totalorder %s98, 0
      %s101 = sadd.s32 %s100, 1
      %s102 = scalar_select %p99, %s100, %s101
      %p105 = pneg %p99
      %p106 = scmp.eq.s32.totalorder %s22, 1
      %p107 = por %p105, %p106
      %p108 = scmp.ne.s32.totalorder %s100, %s103
      %p109 = scmp.eq.s32.totalorder %s22, 0
      %p110 = por %p108, %p109
      %p111 = scmp.ne.s32.totalorder %s100, %s103
      %p112 = scmp.eq.s32.totalorder %s27, 1
      %p113 = por %p111, %p112
      %p114 = scmp.ne.s32.totalorder %s103, %s104
      %p115 = scmp.eq.s32.totalorder %s27, 0
      %p116 = por %p114, %p115
      %p117 = scmp.ne.s32.totalorder %s103, %s104
      %p118 = scmp.eq.s32.totalorder %s28, 1
      %p119 = por %p117, %p118
      %p121 = scmp.ne.s32.totalorder %s104, %s120
      %p122 = scmp.eq.s32.totalorder %s28, 0
      %p123 = por %p121, %p122
      %s124 = ssub.s32 %s30, %s37
      %s125 = ssub.s32 %s29, %s41
      %s126 = sor.u32 %s124, %s125
      %p127 = scmp.eq.s32.totalorder %s126, 0
      %s129 = sadd.s32 %s128, 1
      %s130 = scalar_select %p127, %s128, %s129
      %p133 = pneg %p127
      %p134 = scmp.eq.s32.totalorder %s22, 1
      %p135 = por %p133, %p134
      %p136 = scmp.ne.s32.totalorder %s128, %s131
      %p137 = scmp.eq.s32.totalorder %s22, 0
      %p138 = por %p136, %p137
      %p139 = scmp.ne.s32.totalorder %s128, %s131
      %p140 = scmp.eq.s32.totalorder %s27, 1
      %p141 = por %p139, %p140
      %p142 = scmp.ne.s32.totalorder %s131, %s132
      %p143 = scmp.eq.s32.totalorder %s27, 0
      %p144 = por %p142, %p143
      %p145 = scmp.ne.s32.totalorder %s131, %s132
      %p146 = scmp.eq.s32.totalorder %s28, 1
      %p147 = por %p145, %p146
      %p149 = scmp.ne.s32.totalorder %s132, %s148
      %p150 = scmp.eq.s32.totalorder %s28, 0
      %p151 = por %p149, %p150
      %s152 = ssub.s32 %s30, %s37
      %s153 = ssub.s32 %s29, %s41
      %s154 = sor.u32 %s152, %s153
      %p155 = scmp.eq.s32.totalorder %s154, 0
      %s157 = sadd.s32 %s156, 1
      %s158 = scalar_select %p155, %s156, %s157
      %p161 = pneg %p155
      %p162 = scmp.eq.s32.totalorder %s22, 1
      %p163 = por %p161, %p162
      %p164 = scmp.ne.s32.totalorder %s156, %s159
      %p165 = scmp.eq.s32.totalorder %s22, 0
      %p166 = por %p164, %p165
      %p167 = scmp.ne.s32.totalorder %s156, %s159
      %p168 = scmp.eq.s32.totalorder %s27, 1
      %p169 = por %p167, %p168
      %p170 = scmp.ne.s32.totalorder %s159, %s160
      %p171 = scmp.eq.s32.totalorder %s27, 0
      %p172 = por %p170, %p171
      %p173 = scmp.ne.s32.totalorder %s159, %s160
      %p174 = scmp.eq.s32.totalorder %s28, 1
      %p175 = por %p173, %p174
      %p177 = scmp.ne.s32.totalorder %s160, %s176
      %p178 = scmp.eq.s32.totalorder %s28, 0
      %p179 = por %p177, %p178
      %p180 = scmp.le.s32.totalorder 1, %s22
      %p181 = scmp.lt.s32.totalorder %s22, 3
      %p182 = pnand %p180, %p181
      %p183 = pneg %p182
      // Predicated region
      $region9: #{tpu_custom_call.1} parent=5 // pred_check
        _
      $region10: #{tpu_custom_call.1} parent=5 // pred_check_branch
        %185 = sbr.rel (%p182) target = $region12
      $region11: #{tpu_custom_call.1} parent=5 // pred_region
        %s186 = ssub.s32 %s22, 1
      $region12: #{tpu_custom_call.1} parent=5 // pred_fallthru
        _
      %p187 = scmp.lt.s32.totalorder %s22, 2
      // Predicated region
      $region13: #{tpu_custom_call.1} parent=5 // pred_check
        %p188 = pneg %p187
      $region14: #{tpu_custom_call.1} parent=5 // pred_check_branch
        %190 = sbr.rel (%p188) target = $region16
      $region15: #{tpu_custom_call.1} parent=5 // pred_region
        // Predicated region
        $region17: #{tpu_custom_call.1} parent=15 // pred_check
          %p191 = pneg %p54
        $region18: #{tpu_custom_call.1} parent=15 // pred_check_branch
          %193 = sbr.rel (%p191) target = $region20
        $region19: #{tpu_custom_call.1} parent=15 // pred_region
          %s194 = sand.u32 %s44, 1
          %s195 = scalar_lea.sflag [#allocation3], %s194
          %s196 = sand.u32 %s44, 1
          %s197 = smul.addr %s196, 4
          %s198 = scalar_lea.vmem [#allocation2], %s197
          %s200 = ssub.s32 64, 64
          %201 = vsyncadd %s195, %s200
          %s202 = smul.addr %s29, 64
          %s203 = scalar_lea.hbm %s0, %s202
          %s205 = sshll.u32 %s198, 4
          %s206 = int_to_ptr.vmem [resolvable:$true] %s205
          %208 = dma.hbm_to_vmem [thread:$0]  %s203, 64, %s206, %s195
        $region20: #{tpu_custom_call.1} parent=15 // pred_fallthru
          _
        // Predicated region
        $region21: #{tpu_custom_call.1} parent=15 // pred_check
          %p209 = pneg %p82
        $region22: #{tpu_custom_call.1} parent=15 // pred_check_branch
          %211 = sbr.rel (%p209) target = $region24
        $region23: #{tpu_custom_call.1} parent=15 // pred_region
          %s212 = sand.u32 %s22, 1
          %s213 = scalar_lea.sflag [#allocation6], %s212
          %s214 = sand.u32 %s72, 1
          %s215 = smul.addr %s214, 8
          %s216 = scalar_lea.vmem [#allocation5], %s215
          %s218 = ssub.s32 128, 128
          %219 = vsyncadd %s213, %s218
          %s220 = smul.addr %s30, 2
          %s221 = sadd.s32 %s29, %s220
          %s222 = smul.addr %s221, 128
          %s223 = scalar_lea.hbm %s1, %s222
          %s225 = sshll.u32 %s216, 4
          %s226 = int_to_ptr.vmem [resolvable:$true] %s225
          %228 = dma.hbm_to_vmem [thread:$0]  %s223, 128, %s226, %s213
        $region24: #{tpu_custom_call.1} parent=15 // pred_fallthru
          _
        // Predicated region
        $region25: #{tpu_custom_call.1} parent=15 // pred_check
          %p229 = pneg %p110
        $region26: #{tpu_custom_call.1} parent=15 // pred_check_branch
          %231 = sbr.rel (%p229) target = $region28
        $region27: #{tpu_custom_call.1} parent=15 // pred_region
          %s232 = sand.u32 %s22, 1
          %s233 = scalar_lea.sflag [#allocation6], %s232
          %s234 = sand.u32 %s100, 1
          %s235 = smul.addr %s234, 8
          %s236 = scalar_lea.vmem [#allocation7], %s235
          %s238 = ssub.s32 128, 128
          %239 = vsyncadd %s233, %s238
          %s240 = smul.addr %s30, 2
          %s241 = sadd.s32 %s29, %s240
          %s242 = smul.addr %s241, 128
          %s243 = scalar_lea.hbm %s2, %s242
          %s245 = sshll.u32 %s236, 4
          %s246 = int_to_ptr.vmem [resolvable:$true] %s245
          %248 = dma.hbm_to_vmem [thread:$0]  %s243, 128, %s246, %s233
        $region28: #{tpu_custom_call.1} parent=15 // pred_fallthru
          _
        // Predicated region
        $region29: #{tpu_custom_call.1} parent=15 // pred_check
          %p249 = pneg %p138
        $region30: #{tpu_custom_call.1} parent=15 // pred_check_branch
          %251 = sbr.rel (%p249) target = $region32
        $region31: #{tpu_custom_call.1} parent=15 // pred_region
          %s252 = sand.u32 %s128, 1
          %s253 = scalar_lea.sflag [#allocation9], %s252
          %s254 = sand.u32 %s128, 1
          %s255 = smul.addr %s254, 8
          %s256 = scalar_lea.vmem [#allocation8], %s255
          %s258 = ssub.s32 128, 128
          %259 = vsyncadd %s253, %s258
          %s260 = smul.addr %s30, 2
          %s261 = sadd.s32 %s29, %s260
          %s262 = smul.addr %s261, 128
          %s263 = scalar_lea.hbm %s3, %s262
          %s265 = sshll.u32 %s256, 4
          %s266 = int_to_ptr.vmem [resolvable:$true] %s265
          %268 = dma.hbm_to_vmem [thread:$0]  %s263, 128, %s266, %s253
        $region32: #{tpu_custom_call.1} parent=15 // pred_fallthru
          _
      $region16: #{tpu_custom_call.1} parent=5 // pred_fallthru
        _
      %p269 = scmp.le.s32.totalorder 1, %s22
      %p270 = scmp.lt.s32.totalorder %s22, 3
      %p271 = pnand %p269, %p270
      %p272 = pneg %p271
      // Predicated region
      $region33: #{tpu_custom_call.1} parent=5 // pred_check
        _
      $region34: #{tpu_custom_call.1} parent=5 // pred_check_branch
        %274 = sbr.rel (%p271) target = $region36
      $region35: #{tpu_custom_call.1} parent=5 // pred_region
        %s275 = ssub.s32 %s22, 1
        %s276 = sand.u32 %s47, 1
        %s277 = scalar_lea.sflag [#allocation3], %s276
        %s278 = sand.u32 %s47, 1
        %s279 = smul.addr %s278, 4
        %s280 = scalar_lea.vmem [#allocation2], %s279
        // Predicated region
        $region37: #{tpu_custom_call.1} parent=35 // pred_check
          %p281 = pneg %p60
        $region38: #{tpu_custom_call.1} parent=35 // pred_check_branch
          %283 = sbr.rel (%p281) target = $region40
        $region39: #{tpu_custom_call.1} parent=35 // pred_region
          %284 = dma.done %s277, 64
        $region40: #{tpu_custom_call.1} parent=35 // pred_fallthru
          _
        %s285 = sand.u32 %s27, 1
        %s286 = scalar_lea.sflag [#allocation6], %s285
        %s287 = sand.u32 %s75, 1
        %s288 = smul.addr %s287, 8
        %s289 = scalar_lea.vmem [#allocation5], %s288
        // Predicated region
        $region41: #{tpu_custom_call.1} parent=35 // pred_check
          %p290 = pneg %p88
        $region42: #{tpu_custom_call.1} parent=35 // pred_check_branch
          %292 = sbr.rel (%p290) target = $region44
        $region43: #{tpu_custom_call.1} parent=35 // pred_region
          %293 = dma.done %s286, 128
        $region44: #{tpu_custom_call.1} parent=35 // pred_fallthru
          _
        %s294 = sand.u32 %s27, 1
        %s295 = scalar_lea.sflag [#allocation6], %s294
        %s296 = sand.u32 %s103, 1
        %s297 = smul.addr %s296, 8
        %s298 = scalar_lea.vmem [#allocation7], %s297
        // Predicated region
        $region45: #{tpu_custom_call.1} parent=35 // pred_check
          %p299 = pneg %p116
        $region46: #{tpu_custom_call.1} parent=35 // pred_check_branch
          %301 = sbr.rel (%p299) target = $region48
        $region47: #{tpu_custom_call.1} parent=35 // pred_region
          %302 = dma.done %s295, 128
        $region48: #{tpu_custom_call.1} parent=35 // pred_fallthru
          _
        %s303 = sand.u32 %s131, 1
        %s304 = scalar_lea.sflag [#allocation9], %s303
        %s305 = sand.u32 %s131, 1
        %s306 = smul.addr %s305, 8
        %s307 = scalar_lea.vmem [#allocation8], %s306
        // Predicated region
        $region49: #{tpu_custom_call.1} parent=35 // pred_check
          %p308 = pneg %p144
        $region50: #{tpu_custom_call.1} parent=35 // pred_check_branch
          %310 = sbr.rel (%p308) target = $region52
        $region51: #{tpu_custom_call.1} parent=35 // pred_region
          %311 = dma.done %s304, 128
        $region52: #{tpu_custom_call.1} parent=35 // pred_fallthru
          _
        %s312 = sand.u32 %s47, 1
        %s313 = scalar_lea.sflag [#allocation3], %s312
        %s314 = sand.u32 %s47, 1
        %s315 = smul.addr %s314, 4
        %s316 = scalar_lea.vmem [#allocation2], %s315
        %p317 = pneg %p60
        %p318 = pneg %p57
        %s319 = sand.u32 %s27, 1
        %s320 = scalar_lea.sflag [#allocation6], %s319
        %s321 = sand.u32 %s75, 1
        %s322 = smul.addr %s321, 8
        %s323 = scalar_lea.vmem [#allocation5], %s322
        %p324 = pneg %p88
        %p325 = pneg %p85
        %s326 = sand.u32 %s27, 1
        %s327 = scalar_lea.sflag [#allocation6], %s326
        %s328 = sand.u32 %s103, 1
        %s329 = smul.addr %s328, 8
        %s330 = scalar_lea.vmem [#allocation7], %s329
        %p331 = pneg %p116
        %p332 = pneg %p113
        %s333 = sand.u32 %s131, 1
        %s334 = scalar_lea.sflag [#allocation9], %s333
        %s335 = sand.u32 %s131, 1
        %s336 = smul.addr %s335, 8
        %s337 = scalar_lea.vmem [#allocation8], %s336
        %p338 = pneg %p144
        %p339 = pneg %p141
        %p340 = pneg %p172
        %p341 = pneg %p169
        %s342 = sand.u32 %s159, 1
        %s343 = scalar_lea.sflag [#allocation4], %s342
        %s344 = sand.u32 %s159, 1
        %s345 = smul.addr %s344, 8
        %s346 = scalar_lea.vmem [#allocation10], %s345
        %v347 = vld [vmem:[%s289] sm:$0xff]
        %v348 = vand.u32 2147483647, %v347
        %v349 = vsub.f32 0.0, %v348
        %v350 = vmul.f32 %v349, 1.442695
        %v351 = vpow.pop %v350
        %v352 = vadd.f32 %v351, 1.0
        %v353 = vrcp.pop %v352
        %v354 = vmul.f32 %v352, %v353
        %v355 = vsub.f32 2.0, %v354
        %v356 = vmul.f32 %v353, %v355
        %v357 = vmul.f32 %v351, %v356
        %vm358 = vcmp.ge.f32.partialorder %v347, 0.0
        %v359 = vsel %vm358, %v356, %v357
        %v360 = vsel %vm358, %v357, %v356
        %v361 = vld [vmem:[%s280] sm:$0x1]
        %v362 = vlaneseq
        %v363 = vshrl.u32 %v362, 7
        %v364 = vsub.s32 0, %v363
        %v365 = vrot.slane %v361, %v364
        %v366 = vmul.f32 %v365, %v359
        %v367 = vmul.f32 %v365, %v360
        %v368 = vld [vmem:[%s298] sm:$0xff]
        %v369 = vand.u32 2147483647, %v368
        %v370 = vsub.f32 0.0, %v369
        %v371 = vmul.f32 %v370, 1.442695
        %v372 = vpow.pop %v371
        %v373 = vadd.f32 %v372, 1.0
        %v374 = vrcp.pop %v373
        %v375 = vmul.f32 %v373, %v374
        %v376 = vsub.f32 2.0, %v375
        %v377 = vmul.f32 %v374, %v376
        %v378 = vmul.f32 %v372, %v377
        %vm379 = vcmp.ge.f32.partialorder %v368, 0.0
        %v380 = vsel %vm379, %v377, %v378
        %v381 = vsel %vm379, %v378, %v377
        %v382 = vld [vmem:[%s280 + $0x1] sm:$0x1]
        %v383 = vlaneseq
        %v384 = vshrl.u32 %v383, 7
        %v385 = vsub.s32 0, %v384
        %v386 = vrot.slane %v382, %v385
        %v387 = vmul.f32 %v386, %v380
        %v388 = vadd.f32 %v366, %v387
        %v389 = vmul.f32 %v386, %v381
        %v390 = vadd.f32 %v367, %v389
        %v391 = vld [vmem:[%s307] sm:$0xff]
        %v392 = vand.u32 2147483647, %v391
        %v393 = vsub.f32 0.0, %v392
        %v394 = vmul.f32 %v393, 1.442695
        %v395 = vpow.pop %v394
        %v396 = vadd.f32 %v395, 1.0
        %v397 = vrcp.pop %v396
        %v398 = vmul.f32 %v396, %v397
        %v399 = vsub.f32 2.0, %v398
        %v400 = vmul.f32 %v397, %v399
        %v401 = vmul.f32 %v395, %v400
        %vm402 = vcmp.ge.f32.partialorder %v391, 0.0
        %v403 = vsel %vm402, %v400, %v401
        %v404 = vsel %vm402, %v401, %v400
        %v405 = vld [vmem:[%s280 + $0x2] sm:$0x1]
        %v406 = vlaneseq
        %v407 = vshrl.u32 %v406, 7
        %v408 = vsub.s32 0, %v407
        %v409 = vrot.slane %v405, %v408
        %v410 = vmul.f32 %v409, %v403
        %v411 = vadd.f32 %v388, %v410
        %v412 = vmul.f32 %v409, %v404
        %v413 = vadd.f32 %v390, %v412
        %v414 = vlog2.pop %v411
        %v415 = vmul.f32 %v414, 0.6931472
        %v416 = vlog2.pop %v413
        %v417 = vmul.f32 %v416, 0.6931472
        %v418 = vsub.f32 %v415, %v417
        %419 = vst [vmem:[%s346] sm:$0xff] %v418
        %s420 = sand.u32 %s159, 1
        %s421 = scalar_lea.sflag [#allocation4], %s420
        %s422 = sand.u32 %s159, 1
        %s423 = smul.addr %s422, 8
        %s424 = scalar_lea.vmem [#allocation10], %s423
        // Predicated region
        $region53: #{tpu_custom_call.1} parent=35 // pred_check
          %p425 = pneg %p169
        $region54: #{tpu_custom_call.1} parent=35 // pred_check_branch
          %427 = sbr.rel (%p425) target = $region56
        $region55: #{tpu_custom_call.1} parent=35 // pred_region
          %s429 = ssub.s32 128, 128
          %430 = vsyncadd %s421, %s429
          %s431 = smul.addr %s32, 2
          %s432 = sadd.s32 %s31, %s431
          %s433 = smul.addr %s432, 128
          %s434 = scalar_lea.hbm %s4, %s433
          %s436 = sshll.u32 %s424, 4
          %s437 = int_to_ptr.vmem [resolvable:$true] %s436
          %439 = dma.vmem_to_hbm [thread:$0]  %s437, 128, %s434, %s421
        $region56: #{tpu_custom_call.1} parent=35 // pred_fallthru
          _
      $region36: #{tpu_custom_call.1} parent=5 // pred_fallthru
        _
      %p440 = scmp.le.s32.totalorder 2, %s22
      // Predicated region
      $region57: #{tpu_custom_call.1} parent=5 // pred_check
        %p441 = pneg %p440
      $region58: #{tpu_custom_call.1} parent=5 // pred_check_branch
        %443 = sbr.rel (%p441) target = $region60
      $region59: #{tpu_custom_call.1} parent=5 // pred_region
        %s444 = ssub.s32 %s22, 2
        // Predicated region
        $region61: #{tpu_custom_call.1} parent=59 // pred_check
          %p445 = pneg %p175
        $region62: #{tpu_custom_call.1} parent=59 // pred_check_branch
          %447 = sbr.rel (%p445) target = $region64
        $region63: #{tpu_custom_call.1} parent=59 // pred_region
          %s448 = sand.u32 %s160, 1
          %s449 = scalar_lea.sflag [#allocation4], %s448
          %s450 = sand.u32 %s160, 1
          %s451 = smul.addr %s450, 8
          %s452 = scalar_lea.vmem [#allocation10], %s451
          %453 = dma.done %s449, 128
        $region64: #{tpu_custom_call.1} parent=59 // pred_fallthru
          _
      $region60: #{tpu_custom_call.1} parent=5 // pred_fallthru
        _
    $region6: #{tpu_custom_call.1} parent=1 // loop_footer
      %s26 = sadd.s32 1, %s22
    $region7: #{tpu_custom_call.1} parent=1 // loop_footer_branch
      %21 = sbr.rel target = $region3
    $region8: #{tpu_custom_call.1} parent=1 // loop_exit
      _
    %454 = vsyncpa [#allocation3], 1
    %s455 = scalar_lea.sflag [#allocation3], 1
    %456 = vsyncpa %s455, 1
    %457 = vsyncpa [#allocation6], 1
    %s458 = scalar_lea.sflag [#allocation6], 1
    %459 = vsyncpa %s458, 1
    %460 = vsyncpa [#allocation9], 1
    %s461 = scalar_lea.sflag [#allocation9], 1
    %462 = vsyncpa %s461, 1
    %463 = vsyncpa [#allocation4], 1
    %s464 = scalar_lea.sflag [#allocation4], 1
    %465 = vsyncpa %s464, 1

</llo_original>
